<compile_context>
chip_gen: v5e
topology: v5e:2x2
jax: 0.10.0
libtpu: 0.0.40
codegen_flags: <defaults>
</compile_context>

<pallas_src>
import functools

import jax
import jax.numpy as jnp
from jax import lax
from jax.experimental import pallas as pl
from jax.experimental.pallas import tpu as pltpu

_LANE = 128
_SUBLANE = 8


def _round_up(x, m):
    return (x + m - 1) // m * m


def net_kernel(x_ref, w1_ref, b1_ref, wh_ref, bh_ref, out_ref, *, action_num):
    # fc1 + relu                                  (TB, HP)
    h = jnp.dot(x_ref[...], w1_ref[...], preferred_element_type=jnp.float32)
    h = jnp.maximum(h + b1_ref[...], 0.0)

    # fused heads: cols [0:A] = action logits, col A = value, rest zero-pad
    z = jnp.dot(h, wh_ref[...], preferred_element_type=jnp.float32)
    z = z + bh_ref[...]                           # (TB, HEADP)

    col = lax.broadcasted_iota(jnp.int32, z.shape, dimension=1)
    is_action = col < action_num

    # log_softmax restricted to the first `action_num` real columns
    m = jnp.max(jnp.where(is_action, z, -jnp.inf), axis=1, keepdims=True)
    s = z - m
    denom = jnp.sum(jnp.where(is_action, jnp.exp(s), 0.0), axis=1, keepdims=True)
    logp = s - jnp.log(denom)

    # single lane-dense store: action cols <- log-probs, other cols <- tanh(z)
    # (column A is tanh(value); padded cols hold tanh(0)=0 and are sliced off)
    out_ref[...] = jnp.where(is_action, logp, jnp.tanh(z))


def net_forward(x, w1, b1, wa, ba, wv, bv, *, block_b=256):
    """Forward pass of `Net`.

    x:  (B, S) f32
    w1: (S, H), b1: (1, H)   -- weights stored as (in_features, out_features)
    wa: (H, A), ba: (1, A)
    wv: (H, 1), bv: (1, 1)
    returns (log_probs (B, A), values (B, 1))
    """
    B, S = x.shape
    H = w1.shape[1]
    A = wa.shape[1]

    b1 = jnp.reshape(b1, (1, H))
    ba = jnp.reshape(ba, (1, A))
    bv = jnp.reshape(bv, (1, 1))

    # ---- pad hidden dim to a full lane width (zero pads keep math exact) ----
    HP = _round_up(H, _LANE)
    w1p = jnp.zeros((S, HP), jnp.float32).at[:, :H].set(w1)
    b1p = jnp.zeros((1, HP), jnp.float32).at[:, :H].set(b1)

    # ---- fuse the two heads into one lane-dense (HP, HEADP) weight ----------
    HEADP = _round_up(A + 1, _LANE)
    wh = jnp.zeros((HP, HEADP), jnp.float32)
    wh = wh.at[:H, :A].set(wa).at[:H, A].set(wv[:, 0])
    bh = jnp.zeros((1, HEADP), jnp.float32)
    bh = bh.at[:, :A].set(ba).at[:, A].set(bv[0, 0])

    # ---- pad batch to a multiple of the batch tile ---------------------------
    BP = _round_up(max(B, _SUBLANE), _SUBLANE)
    TB = min(block_b, BP)
    BP = _round_up(BP, TB)
    xp = jnp.zeros((BP, S), jnp.float32).at[:B, :].set(x)

    kernel = functools.partial(net_kernel, action_num=A)

    out = pl.pallas_call(
        kernel,
        out_shape=jax.ShapeDtypeStruct((BP, HEADP), jnp.float32),
        grid_spec=pltpu.PrefetchScalarGridSpec(
            num_scalar_prefetch=0,
            grid=(BP // TB,),
            in_specs=[
                pl.BlockSpec((TB, S), lambda i: (i, 0)),        # x: tiled over batch
                pl.BlockSpec((S, HP), lambda i: (0, 0)),        # weights resident in VMEM
                pl.BlockSpec((1, HP), lambda i: (0, 0)),
                pl.BlockSpec((HP, HEADP), lambda i: (0, 0)),
                pl.BlockSpec((1, HEADP), lambda i: (0, 0)),
            ],
            out_specs=pl.BlockSpec((TB, HEADP), lambda i: (i, 0)),
        ),
        compiler_params=pltpu.CompilerParams(
            dimension_semantics=("parallel",),   # shards batch across 2 TCs on v7x
        ),
    )(xp, w1p, b1p, wh, bh)

    logp = out[:B, :A]
    vals = out[:B, A:A + 1]
    return logp, vals


def reference_forward(x, w1, b1, wa, ba, wv, bv):
    h = jnp.maximum(x @ w1 + b1, 0.0)
    a = h @ wa + ba
    v = h @ wv + bv
    return jax.nn.log_softmax(a, axis=1), jnp.tanh(v)


if __name__ == "__main__":
    # Small shapes consistent with the module
    B = 2            # batch
    STATE_NUM = 16   # state_num
    ACTION_NUM = 8   # action_num
    HIDDEN = 100     # fixed by the module

    key = jax.random.PRNGKey(0)
    kx, k1, k2, k3, kb1, kb2, kb3 = jax.random.split(key, 7)

    x = jax.random.normal(kx, (B, STATE_NUM), dtype=jnp.float32)

    # weights: normal(0, 0.1), matching `weight.data.normal_(0, 0.1)`;
    # stored as (in, out). Biases: small deterministic uniform (analogous to
    # nn.Linear's default bias init).
    w1 = 0.1 * jax.random.normal(k1, (STATE_NUM, HIDDEN), dtype=jnp.float32)
    wa = 0.1 * jax.random.normal(k2, (HIDDEN, ACTION_NUM), dtype=jnp.float32)
    wv = 0.1 * jax.random.normal(k3, (HIDDEN, 1), dtype=jnp.float32)
    b1 = 0.05 * jax.random.uniform(kb1, (1, HIDDEN), dtype=jnp.float32, minval=-1.0, maxval=1.0)
    ba = 0.05 * jax.random.uniform(kb2, (1, ACTION_NUM), dtype=jnp.float32, minval=-1.0, maxval=1.0)
    bv = 0.05 * jax.random.uniform(kb3, (1, 1), dtype=jnp.float32, minval=-1.0, maxval=1.0)

    logp, vals = net_forward(x, w1, b1, wa, ba, wv, bv)
    logp = jax.block_until_ready(logp)
    vals = jax.block_until_ready(vals)

    logp_ref, vals_ref = reference_forward(x, w1, b1, wa, ba, wv, bv)
    assert logp.shape == (B, ACTION_NUM)
    assert vals.shape == (B, 1)
    assert jnp.allclose(logp, logp_ref, atol=1e-5, rtol=1e-5)
    assert jnp.allclose(vals, vals_ref, atol=1e-5, rtol=1e-5)

    print("KERNEL_OK")
</pallas_src>

<mosaic_0001>
module attributes {stable_mosaic.version = 11 : i64} {
  func.func @net_kernel(%arg0: i32, %arg1: memref<8x16xf32, #tpu.memory_space<vmem>>, %arg2: memref<16x128xf32, #tpu.memory_space<vmem>>, %arg3: memref<1x128xf32, #tpu.memory_space<vmem>>, %arg4: memref<128x128xf32, #tpu.memory_space<vmem>>, %arg5: memref<1x128xf32, #tpu.memory_space<vmem>>, %arg6: memref<8x128xf32, #tpu.memory_space<vmem>>) attributes {dimension_semantics = [#tpu.dimension_semantics<parallel>], iteration_bounds = array<i64: 1>, scalar_prefetch = 0 : i64, scratch_operands = 0 : i64, tpu.core_type = #tpu.core_type<tc>, window_params = [{transform_indices = @transform_0, window_bounds = array<i64: 8, 16>}, {pipeline_mode = #tpu.pipeline_mode<synchronous>, transform_indices = @transform_1, window_bounds = array<i64: 16, 128>}, {pipeline_mode = #tpu.pipeline_mode<synchronous>, transform_indices = @transform_2, window_bounds = array<i64: 1, 128>}, {pipeline_mode = #tpu.pipeline_mode<synchronous>, transform_indices = @transform_3, window_bounds = array<i64: 128, 128>}, {pipeline_mode = #tpu.pipeline_mode<synchronous>, transform_indices = @transform_4, window_bounds = array<i64: 1, 128>}, {transform_indices = @transform_5, window_bounds = array<i64: 8, 128>}]} {
    %c0 = arith.constant 0 : index
    %c0_0 = arith.constant 0 : index
    %0 = vector.load %arg1[%c0, %c0_0] : memref<8x16xf32, #tpu.memory_space<vmem>>, vector<8x16xf32>
    %c0_1 = arith.constant 0 : index
    %c0_2 = arith.constant 0 : index
    %1 = vector.load %arg2[%c0_1, %c0_2] : memref<16x128xf32, #tpu.memory_space<vmem>>, vector<16x128xf32>
    %cst = arith.constant dense<0.000000e+00> : vector<8x128xf32>
    %2 = tpu.matmul %0, %1, %cst {dimension_numbers = #tpu.dot_dimension_numbers<[1], [0], [0], [1], [0, 0, 1, 1], [], []>} : vector<8x16xf32>, vector<16x128xf32>, vector<8x128xf32> -> vector<8x128xf32>
    %c0_3 = arith.constant 0 : index
    %c0_4 = arith.constant 0 : index
    %3 = vector.load %arg3[%c0_3, %c0_4] : memref<1x128xf32, #tpu.memory_space<vmem>>, vector<1x128xf32>
    %4 = vector.broadcast %3 : vector<1x128xf32> to vector<8x128xf32>
    %5 = arith.addf %2, %4 : vector<8x128xf32>
    %cst_5 = arith.constant 0.000000e+00 : f32
    %6 = vector.broadcast %cst_5 : f32 to vector<8x128xf32>
    %7 = arith.maximumf %5, %6 : vector<8x128xf32>
    %c0_6 = arith.constant 0 : index
    %c0_7 = arith.constant 0 : index
    %8 = vector.load %arg4[%c0_6, %c0_7] : memref<128x128xf32, #tpu.memory_space<vmem>>, vector<128x128xf32>
    %cst_8 = arith.constant dense<0.000000e+00> : vector<8x128xf32>
    %9 = tpu.matmul %7, %8, %cst_8 {dimension_numbers = #tpu.dot_dimension_numbers<[1], [0], [0], [1], [0, 0, 1, 1], [], []>} : vector<8x128xf32>, vector<128x128xf32>, vector<8x128xf32> -> vector<8x128xf32>
    %c0_9 = arith.constant 0 : index
    %c0_10 = arith.constant 0 : index
    %10 = vector.load %arg5[%c0_9, %c0_10] : memref<1x128xf32, #tpu.memory_space<vmem>>, vector<1x128xf32>
    %11 = vector.broadcast %10 : vector<1x128xf32> to vector<8x128xf32>
    %12 = arith.addf %9, %11 : vector<8x128xf32>
    %13 = tpu.iota {dimensions = array<i32: 1>} : vector<8x128xi32>
    %c8_i32 = arith.constant 8 : i32
    %14 = vector.broadcast %c8_i32 : i32 to vector<8x128xi32>
    %15 = arith.cmpi slt, %13, %14 : vector<8x128xi32>
    %cst_11 = arith.constant 0xFF800000 : f32
    %16 = vector.broadcast %cst_11 : f32 to vector<8x128xf32>
    %17 = arith.select %15, %12, %16 : vector<8x128xi1>, vector<8x128xf32>
    %cst_12 = arith.constant dense<0xFF800000> : vector<8xf32>
    %18 = vector.multi_reduction <maximumf>, %17, %cst_12 [1] : vector<8x128xf32> to vector<8xf32>
    %19 = vector.shape_cast %18 : vector<8xf32> to vector<8x1xf32>
    %20 = vector.broadcast %19 : vector<8x1xf32> to vector<8x128xf32>
    %21 = arith.subf %12, %20 : vector<8x128xf32>
    %22 = math.exp %21 : vector<8x128xf32>
    %cst_13 = arith.constant 0.000000e+00 : f32
    %23 = vector.broadcast %cst_13 : f32 to vector<8x128xf32>
    %24 = arith.select %15, %22, %23 : vector<8x128xi1>, vector<8x128xf32>
    %cst_14 = arith.constant dense<0.000000e+00> : vector<8xf32>
    %25 = vector.multi_reduction <add>, %24, %cst_14 [1] : vector<8x128xf32> to vector<8xf32>
    %26 = vector.shape_cast %25 : vector<8xf32> to vector<8x1xf32>
    %27 = math.log %26 : vector<8x1xf32>
    %28 = vector.broadcast %27 : vector<8x1xf32> to vector<8x128xf32>
    %29 = arith.subf %21, %28 : vector<8x128xf32>
    %30 = math.tanh %12 : vector<8x128xf32>
    %31 = arith.select %15, %29, %30 : vector<8x128xi1>, vector<8x128xf32>
    %c0_15 = arith.constant 0 : index
    %c0_16 = arith.constant 0 : index
    %32 = vector.load %arg6[%c0_15, %c0_16] : memref<8x128xf32, #tpu.memory_space<vmem>>, vector<8x128xf32>
    tpu.vector_store %arg6[%c0_15, %c0_16], %31 {strides = array<i32>} : memref<8x128xf32, #tpu.memory_space<vmem>>, vector<8x128xf32>,
    return
  }
  func.func @transform_0(%arg0: i32) -> (i32, i32) {
    %c0_i32 = arith.constant 0 : i32
    %c0_i32_0 = arith.constant 0 : i32
    return %arg0, %c0_i32 : i32, i32
  }
  func.func @transform_1(%arg0: i32) -> (i32, i32) {
    %c0_i32 = arith.constant 0 : i32
    %c0_i32_0 = arith.constant 0 : i32
    %c0_i32_1 = arith.constant 0 : i32
    return %c0_i32, %c0_i32_0 : i32, i32
  }
  func.func @transform_2(%arg0: i32) -> (i32, i32) {
    %c0_i32 = arith.constant 0 : i32
    %c0_i32_0 = arith.constant 0 : i32
    %c0_i32_1 = arith.constant 0 : i32
    return %c0_i32, %c0_i32_0 : i32, i32
  }
  func.func @transform_3(%arg0: i32) -> (i32, i32) {
    %c0_i32 = arith.constant 0 : i32
    %c0_i32_0 = arith.constant 0 : i32
    %c0_i32_1 = arith.constant 0 : i32
    return %c0_i32, %c0_i32_0 : i32, i32
  }
  func.func @transform_4(%arg0: i32) -> (i32, i32) {
    %c0_i32 = arith.constant 0 : i32
    %c0_i32_0 = arith.constant 0 : i32
    %c0_i32_1 = arith.constant 0 : i32
    return %c0_i32, %c0_i32_0 : i32, i32
  }
  func.func @transform_5(%arg0: i32) -> (i32, i32) {
    %c0_i32 = arith.constant 0 : i32
    %c0_i32_0 = arith.constant 0 : i32
    return %arg0, %c0_i32 : i32, i32
  }
}

</mosaic_0001>

<llo_original>
// kernel: tpu_custom_call.1
$region0: #{tpu_custom_call.1}
  #allocation0 [shape = 'u32[]', space=smem, size = 0x4, offset = 0x4, fixed_abs, tag = 'smem constant byte address 0x4 - core index']
  #allocation1 [shape = 'u32[72,128]{1,0:T(1,128)}', space=vmem, size = 0x9000, scoped, tag = 'internal scratch']
  %s0 = inlined_call_operand.hbm [shape: f32[8,16], index: 0, kind: input, shape index: {}]
  %s1 = inlined_call_operand.hbm [shape: f32[16,128], index: 1, kind: input, shape index: {}]
  %s2 = inlined_call_operand.vmem [shape: f32[1,128], index: 2, kind: input, shape index: {}]
  %s3 = inlined_call_operand.hbm [shape: f32[128,128], index: 3, kind: input, shape index: {}]
  %s4 = inlined_call_operand.vmem [shape: f32[1,128], index: 4, kind: input, shape index: {}]
  %s5 = inlined_call_operand.hbm [shape: f32[8,128], index: 5, kind: output, shape index: {}]
  %s6 = sld [smem:[#allocation0]]
  $region42: #{tpu_custom_call.1} parent=0
    _
  %s8 = ssub.s32 1, %s6
  %s9 = scalar_select 0, %s8, %s6
  $region1: #{tpu_custom_call.1} parent=0
    #allocation2 [shape = 'u8[4096]{0}', space=vmem, size = 0x1000, scoped, tag = 'input window, operand 0, single buffered']
    #allocation3 [shape = 's32[1]{0}', space=sflag, size = 0x4, scoped, tag = 'scoped memory for tpu_custom_call.1']
    #allocation4 [shape = 's32[1]{0}', space=sflag, size = 0x4, scoped, tag = 'scoped memory for tpu_custom_call.1']
    #allocation5 [shape = 'u8[8192]{0}', space=vmem, size = 0x2000, scoped, tag = 'input window, operand 1, single buffered']
    #allocation6 [shape = 's32[1]{0}', space=sflag, size = 0x4, scoped, tag = 'scoped memory for tpu_custom_call.1']
    #allocation7 [shape = 'u8[65536]{0}', space=vmem, size = 0x10000, scoped, tag = 'input window, operand 3, single buffered']
    #allocation8 [shape = 'u8[4096]{0}', space=vmem, size = 0x1000, scoped, tag = 'output window, operand 0, single buffered']
    %10 = vsyncpa [#allocation3], 0
    %11 = vsyncpa [#allocation6], 0
    %12 = vsyncpa [#allocation4], 0
    // Predicated region
    $region2: #{tpu_custom_call.1} parent=1 // pred_check
      _
    $region3: #{tpu_custom_call.1} parent=1 // pred_check_branch
      %14 = sbr.rel (0) target = $region5
    $region4: #{tpu_custom_call.1} parent=1 // pred_region
      %16 = vsyncadd [#allocation3], 0
      %s18 = sshll.u32 %s0, 4
      %s19 = int_to_ptr.hbm [resolvable:$true] %s18
      %s20 = sshll.u32 [#allocation2], 4
      %s21 = int_to_ptr.vmem [resolvable:$true] %s20
      %23 = dma.hbm_to_vmem [thread:$0]  %s19, 128, %s21, [#allocation3]
    $region5: #{tpu_custom_call.1} parent=1 // pred_fallthru
      _
    // Predicated region
    $region6: #{tpu_custom_call.1} parent=1 // pred_check
      _
    $region7: #{tpu_custom_call.1} parent=1 // pred_check_branch
      %25 = sbr.rel (0) target = $region9
    $region8: #{tpu_custom_call.1} parent=1 // pred_region
      %27 = vsyncadd [#allocation6], 0
      %s28 = sshll.u32 %s1, 4
      %s29 = int_to_ptr.hbm [resolvable:$true] %s28
      %s30 = sshll.u32 [#allocation5], 4
      %s31 = int_to_ptr.vmem [resolvable:$true] %s30
      %36 = dma.hbm_to_vmem [thread:$0]  %s29, 256, %s31, [#allocation6], 128, 128, 8
    $region9: #{tpu_custom_call.1} parent=1 // pred_fallthru
      _
    // Predicated region
    $region10: #{tpu_custom_call.1} parent=1 // pred_check
      _
    $region11: #{tpu_custom_call.1} parent=1 // pred_check_branch
      %38 = sbr.rel (0) target = $region13
    $region12: #{tpu_custom_call.1} parent=1 // pred_region
      _
    $region13: #{tpu_custom_call.1} parent=1 // pred_fallthru
      _
    // Predicated region
    $region14: #{tpu_custom_call.1} parent=1 // pred_check
      _
    $region15: #{tpu_custom_call.1} parent=1 // pred_check_branch
      %40 = sbr.rel (0) target = $region17
    $region16: #{tpu_custom_call.1} parent=1 // pred_region
      %42 = vsyncadd [#allocation6], 0
      %s43 = sshll.u32 %s3, 4
      %s44 = int_to_ptr.hbm [resolvable:$true] %s43
      %s45 = sshll.u32 [#allocation7], 4
      %s46 = int_to_ptr.vmem [resolvable:$true] %s45
      %51 = dma.hbm_to_vmem [thread:$0]  %s44, 2048, %s46, [#allocation6], 128, 128, 8
    $region17: #{tpu_custom_call.1} parent=1 // pred_fallthru
      _
    // Predicated region
    $region18: #{tpu_custom_call.1} parent=1 // pred_check
      _
    $region19: #{tpu_custom_call.1} parent=1 // pred_check_branch
      %53 = sbr.rel (0) target = $region21
    $region20: #{tpu_custom_call.1} parent=1 // pred_region
      _
    $region21: #{tpu_custom_call.1} parent=1 // pred_fallthru
      _
    // Predicated region
    $region22: #{tpu_custom_call.1} parent=1 // pred_check
      _
    $region23: #{tpu_custom_call.1} parent=1 // pred_check_branch
      %55 = sbr.rel (0) target = $region25
    $region24: #{tpu_custom_call.1} parent=1 // pred_region
      %57 = dma.done [#allocation3], 128
    $region25: #{tpu_custom_call.1} parent=1 // pred_fallthru
      _
    // Predicated region
    $region26: #{tpu_custom_call.1} parent=1 // pred_check
      _
    $region27: #{tpu_custom_call.1} parent=1 // pred_check_branch
      %59 = sbr.rel (0) target = $region29
    $region28: #{tpu_custom_call.1} parent=1 // pred_region
      %61 = dma.done [#allocation6], 256
    $region29: #{tpu_custom_call.1} parent=1 // pred_fallthru
      _
    // Predicated region
    $region30: #{tpu_custom_call.1} parent=1 // pred_check
      _
    $region31: #{tpu_custom_call.1} parent=1 // pred_check_branch
      %63 = sbr.rel (0) target = $region33
    $region32: #{tpu_custom_call.1} parent=1 // pred_region
      %65 = dma.done [#allocation6], 2048
    $region33: #{tpu_custom_call.1} parent=1 // pred_fallthru
      _
    %v66 = vld [vmem:[#allocation2] sm:$0xff]
    %v67 = vld [vmem:[#allocation5] sm:$0xff]
    %v68 = vld [vmem:[#allocation5 + $0x8] sm:$0xff]
    %v69 = vld [vmem:[%s2] sm:$0x1]
    %v71 = vperm.slane %v69, 0
    %vm73 = vcmask 130048
    %v75 = vsel %vm73, %v66, 0
    %77 = vmatpush.msra.mxu0 0.0
    %78 = vmatpush.msra.mxu0 0.0
    %79 = vmatpush.msra.mxu0 0.0
    %80 = vmatpush.msra.mxu0 0.0
    %81 = vmatpush.msra.mxu0 0.0
    %82 = vmatpush.msra.mxu0 0.0
    %83 = vmatpush.msra.mxu0 0.0
    %84 = vmatpush.msra.mxu0 0.0
    %85 = vmatpush.msra.mxu0 0.0
    %86 = vmatpush.msra.mxu0 0.0
    %87 = vmatpush.msra.mxu0 0.0
    %88 = vmatpush.msra.mxu0 0.0
    %89 = vmatpush.msra.mxu0 0.0
    %90 = vmatpush.msra.mxu0 0.0
    %91 = vmatpush.msra.mxu0 %v68
    %92 = vmatpush.msra.mxu0 %v67
    %93 = vmatmul.f32.gmra.mxu0 %v75
    %v94 = vpop.f32.mrf.mxu0
    %v95 = vadd.f32 %v71, %v94
    %96 = vdwg.mxu0
    %v97 = vmax.f32 %v95, 0.0
    %v98 = vld [vmem:[#allocation7] sm:$0xff]
    %v99 = vld [vmem:[#allocation7 + $0x8] sm:$0xff]
    %v100 = vld [vmem:[#allocation7 + $0x10] sm:$0xff]
    %v101 = vld [vmem:[#allocation7 + $0x18] sm:$0xff]
    %v102 = vld [vmem:[#allocation7 + $0x20] sm:$0xff]
    %v103 = vld [vmem:[#allocation7 + $0x28] sm:$0xff]
    %v104 = vld [vmem:[#allocation7 + $0x30] sm:$0xff]
    %v105 = vld [vmem:[#allocation7 + $0x38] sm:$0xff]
    %v106 = vld [vmem:[#allocation7 + $0x40] sm:$0xff]
    %v107 = vld [vmem:[#allocation7 + $0x48] sm:$0xff]
    %v108 = vld [vmem:[#allocation7 + $0x50] sm:$0xff]
    %v109 = vld [vmem:[#allocation7 + $0x58] sm:$0xff]
    %v110 = vld [vmem:[#allocation7 + $0x60] sm:$0xff]
    %v111 = vld [vmem:[#allocation7 + $0x68] sm:$0xff]
    %v112 = vld [vmem:[#allocation7 + $0x70] sm:$0xff]
    %v113 = vld [vmem:[#allocation7 + $0x78] sm:$0xff]
    %v114 = vld [vmem:[%s4] sm:$0x1]
    %v116 = vperm.slane %v114, 0
    %118 = vmatpush.msra.mxu0 %v113
    %119 = vmatpush.msra.mxu0 %v112
    %120 = vmatpush.msra.mxu0 %v111
    %121 = vmatpush.msra.mxu0 %v110
    %122 = vmatpush.msra.mxu0 %v109
    %123 = vmatpush.msra.mxu0 %v108
    %124 = vmatpush.msra.mxu0 %v107
    %125 = vmatpush.msra.mxu0 %v106
    %126 = vmatpush.msra.mxu0 %v105
    %127 = vmatpush.msra.mxu0 %v104
    %128 = vmatpush.msra.mxu0 %v103
    %129 = vmatpush.msra.mxu0 %v102
    %130 = vmatpush.msra.mxu0 %v101
    %131 = vmatpush.msra.mxu0 %v100
    %132 = vmatpush.msra.mxu0 %v99
    %133 = vmatpush.msra.mxu0 %v98
    %134 = vmatmul.f32.gmra.mxu0 %v97
    %v135 = vpop.f32.mrf.mxu0
    %v136 = vadd.f32 %v116, %v135
    %137 = vdwg.mxu0
    %v138 = vlaneseq
    %v139 = vand.u32 %v138, 127
    %vm140 = vcmp.lt.s32.totalorder %v139, 8
    %v141 = vsel %vm140, %v136, -inf
    %142 = vmax.xlane.f32.xlu0 %v141
    %v143 = vpop.xlane.xlu0 %142
    %v144 = vsub.f32 %v136, %v143
    %v145 = vmul.f32 %v144, 1.442695
    %v146 = vpow.pop %v145
    %v147 = vsel %vm140, %v146, 0.0
    %148 = vadd.xlane.f32.xlu0 %v147
    %v149 = vpop.xlane.xlu0 %148
    %v150 = vlog2.pop %v149
    %v151 = vmul.f32 %v150, 0.6931472
    %v152 = vsub.f32 %v144, %v151
    %v153 = vtanh.pop %v136
    %v154 = vsel %vm140, %v152, %v153
    %155 = vst [vmem:[#allocation8] sm:$0xff] %v154
    // Predicated region
    $region34: #{tpu_custom_call.1} parent=1 // pred_check
      _
    $region35: #{tpu_custom_call.1} parent=1 // pred_check_branch
      %157 = sbr.rel (0) target = $region37
    $region36: #{tpu_custom_call.1} parent=1 // pred_region
      %159 = vsyncadd [#allocation4], 0
      %s161 = sshll.u32 [#allocation8], 4
      %s162 = int_to_ptr.vmem [resolvable:$true] %s161
      %s163 = sshll.u32 %s5, 4
      %s164 = int_to_ptr.hbm [resolvable:$true] %s163
      %166 = dma.vmem_to_hbm [thread:$0]  %s162, 128, %s164, [#allocation4]
    $region37: #{tpu_custom_call.1} parent=1 // pred_fallthru
      _
    // Predicated region
    $region38: #{tpu_custom_call.1} parent=1 // pred_check
      _
    $region39: #{tpu_custom_call.1} parent=1 // pred_check_branch
      %168 = sbr.rel (0) target = $region41
    $region40: #{tpu_custom_call.1} parent=1 // pred_region
      %170 = dma.done [#allocation4], 128
    $region41: #{tpu_custom_call.1} parent=1 // pred_fallthru
      _
    %171 = vsyncpa [#allocation3], 1
    %172 = vsyncpa [#allocation6], 1
    %173 = vsyncpa [#allocation4], 1

</llo_original>
